<compile_context>
chip_gen: v7x
topology: tpu7x:2x2x1
jax: 0.10.0
libtpu: 0.0.40
codegen_flags: <defaults>
</compile_context>

<pallas_src>
import jax
import jax.numpy as jnp
from jax.experimental import pallas as pl
from jax.experimental.pallas import tpu as pltpu

LANE = 128
H1, H2 = 120, 84        # logical hidden widths from the PyTorch spec
H1P, H2P = 128, 128     # lane-padded hidden widths


def _round_up(x, m):
    return (x + m - 1) // m * m


def qnetwork_kernel(x_ref, w1_ref, b1_ref, w2_ref, b2_ref, w3_ref, b3_ref, o_ref):
    # Layer 1: Linear(obs_dim, 120->128) + ReLU. bf16 MXU, f32 accumulate,
    # bias + ReLU on the f32 accumulator (VPU).
    h1 = jnp.dot(x_ref[...], w1_ref[...], preferred_element_type=jnp.float32)
    h1 = jnp.maximum(h1 + b1_ref[...], 0.0)

    # Layer 2: Linear(128, 84->128) + ReLU (re-quantize activation to bf16
    # only for the MXU input; accumulation stays f32).
    h2 = jnp.dot(h1.astype(jnp.bfloat16), w2_ref[...],
                 preferred_element_type=jnp.float32)
    h2 = jnp.maximum(h2 + b2_ref[...], 0.0)

    # Layer 3: compute Q on the lane-padded (tb, 128) tile in-register, but
    # store only the logical n_actions columns (tiny masked store instead of a
    # 128-lane-padded HBM writeback).
    q = jnp.dot(h2.astype(jnp.bfloat16), w3_ref[...],
                preferred_element_type=jnp.float32)
    q = q + b3_ref[...]
    n_act = o_ref.shape[-1]
    o_ref[...] = q[:, :n_act].astype(o_ref.dtype)


def qnetwork_forward(x, padded_params, n_actions, *, block_batch=4096):
    """Fused forward pass. x: [B, obs_dim] f32 (cast to bf16 for the MXU).

    Returns [B, n_actions] f32 Q-values.
    """
    w1, b1, w2, b2, w3, b3 = padded_params
    B, obs_dim = x.shape
    a_pad = w3.shape[1]

    # bf16 input to the MXU (f32 accumulation inside the kernel).
    x = x.astype(jnp.bfloat16)

    # Batch tile: aim for >= 2 grid steps (uses both v7x TensorCores via the
    # "parallel" axis), multiple of 8 sublanes, capped at block_batch so the
    # lane-padded VMEM footprint (~tb * 128 lanes per buffered block) stays
    # well under the 32 MiB scoped VMEM default even on v7x.
    tb = min(block_batch, _round_up(pl.cdiv(max(B, 1), 2), 8))
    grid = (pl.cdiv(B, tb),)   # ragged last block handled by Pallas

    # Advisory cost: real (unpadded) I/O bytes + one pass over the params.
    flops = 2 * B * (obs_dim * H1P + H1P * H2P + H2P * a_pad)
    bytes_accessed = (
        x.size * x.dtype.itemsize
        + sum(p.size * p.dtype.itemsize for p in padded_params)
        + B * n_actions * 4
    )

    const = lambda i: (0, 0)   # params: same (only) block every grid step
    return pl.pallas_call(
        qnetwork_kernel,
        out_shape=jax.ShapeDtypeStruct((B, n_actions), jnp.float32),
        grid=grid,
        in_specs=[
            pl.BlockSpec((tb, obs_dim), lambda i: (i, 0)),   # x: tiled over batch
            pl.BlockSpec((obs_dim, H1P), const),             # W1 (VMEM-resident)
            pl.BlockSpec((1, H1P), const),                   # b1
            pl.BlockSpec((H1P, H2P), const),                 # W2
            pl.BlockSpec((1, H2P), const),                   # b2
            pl.BlockSpec((H2P, a_pad), const),               # W3
            pl.BlockSpec((1, a_pad), const),                 # b3
        ],
        out_specs=pl.BlockSpec((tb, n_actions), lambda i: (i, 0)),
        compiler_params=pltpu.CompilerParams(
            dimension_semantics=("parallel",),               # v7x: use both TCs
        ),
        cost_estimate=pl.CostEstimate(
            flops=flops, transcendentals=0, bytes_accessed=bytes_accessed),
    )(x, w1, b1, w2, b2, w3, b3)


def init_params(key, obs_dim, n_actions):
    """PyTorch-Linear-like uniform init; weights [in, out], biases [out] (f32)."""
    keys = jax.random.split(key, 6)

    def linear(kw, kb, fan_in, fan_out):
        bound = 1.0 / jnp.sqrt(fan_in)
        w = jax.random.uniform(kw, (fan_in, fan_out), jnp.float32, -bound, bound)
        b = jax.random.uniform(kb, (fan_out,), jnp.float32, -bound, bound)
        return w, b

    w1, b1 = linear(keys[0], keys[1], obs_dim, H1)
    w2, b2 = linear(keys[2], keys[3], H1, H2)
    w3, b3 = linear(keys[4], keys[5], H2, n_actions)
    return (w1, b1, w2, b2, w3, b3)


def pad_params(params):
    """Zero-pad hidden widths 120/84 and n_actions up to 128 lanes.

    Zero weight columns/rows and zero bias lanes contribute nothing and
    ReLU(0) = 0, so padded results equal the unpadded network on the real
    columns (and only real columns are stored by the kernel). Weights are cast
    to bf16 for the MXU; biases stay f32 and become [1, out_pad] so the
    in-kernel add is a single broadcast-add on the f32 accumulator.
    """
    w1, b1, w2, b2, w3, b3 = params
    n_actions = w3.shape[1]
    a_pad = _round_up(n_actions, LANE)

    w1p = jnp.pad(w1, ((0, 0), (0, H1P - H1))).astype(jnp.bfloat16)
    b1p = jnp.pad(b1, (0, H1P - H1)).reshape(1, H1P).astype(jnp.float32)
    w2p = jnp.pad(w2, ((0, H1P - H1), (0, H2P - H2))).astype(jnp.bfloat16)
    b2p = jnp.pad(b2, (0, H2P - H2)).reshape(1, H2P).astype(jnp.float32)
    w3p = jnp.pad(w3, ((0, H2P - H2), (0, a_pad - n_actions))).astype(jnp.bfloat16)
    b3p = jnp.pad(b3, (0, a_pad - n_actions)).reshape(1, a_pad).astype(jnp.float32)
    return (w1p, b1p, w2p, b2p, w3p, b3p)


def qnetwork_reference_f32(x, params):
    """Pure-JAX f32 reference mirroring the PyTorch nn.Sequential forward."""
    w1, b1, w2, b2, w3, b3 = params
    h = jnp.maximum(x @ w1 + b1, 0.0)
    h = jnp.maximum(h @ w2 + b2, 0.0)
    return h @ w3 + b3


def qnetwork_reference_bf16(x, padded_params, n_actions):
    """Pure-JAX reference with the same bf16-in / f32-accumulate numerics."""
    w1, b1, w2, b2, w3, b3 = padded_params
    xb = x.astype(jnp.bfloat16)
    h = jnp.maximum(jnp.dot(xb, w1, preferred_element_type=jnp.float32) + b1, 0.0)
    h = jnp.maximum(
        jnp.dot(h.astype(jnp.bfloat16), w2, preferred_element_type=jnp.float32) + b2, 0.0)
    q = jnp.dot(h.astype(jnp.bfloat16), w3, preferred_element_type=jnp.float32) + b3
    return q[:, :n_actions]


if __name__ == "__main__":
    # Small env-like shapes: obs space (8,), 4 discrete actions.
    obs_dim, n_actions = 8, 4

    key = jax.random.PRNGKey(0)
    k_params, k_x1, k_x2 = jax.random.split(key, 3)
    params = init_params(k_params, obs_dim, n_actions)
    padded_params = pad_params(params)

    # Case 1: batch=2 (single, partial grid block).
    x1 = jax.random.normal(k_x1, (2, obs_dim), dtype=jnp.float32)
    out1 = jax.block_until_ready(qnetwork_forward(x1, padded_params, n_actions))
    assert out1.shape == (2, n_actions)
    assert jnp.allclose(out1, qnetwork_reference_bf16(x1, padded_params, n_actions),
                        atol=2e-3, rtol=2e-3)
    assert jnp.allclose(out1, qnetwork_reference_f32(x1, params),
                        atol=5e-2, rtol=5e-2)

    # Case 2: ragged multi-block grid (B=37 -> tb=24, 2 grid steps, ragged tail).
    x2 = jax.random.normal(k_x2, (37, obs_dim), dtype=jnp.float32)
    out2 = jax.block_until_ready(qnetwork_forward(x2, padded_params, n_actions))
    assert out2.shape == (37, n_actions)
    assert jnp.allclose(out2, qnetwork_reference_bf16(x2, padded_params, n_actions),
                        atol=2e-3, rtol=2e-3)
    assert jnp.allclose(out2, qnetwork_reference_f32(x2, params),
                        atol=5e-2, rtol=5e-2)

    print("KERNEL_OK")
</pallas_src>

<mosaic_0001>
module attributes {stable_mosaic.version = 11 : i64} {
  func.func @qnetwork_kernel(%arg0: i32, %arg1: memref<8x8xbf16, #tpu.memory_space<vmem>>, %arg2: memref<8x128xbf16, #tpu.memory_space<vmem>>, %arg3: memref<1x128xf32, #tpu.memory_space<vmem>>, %arg4: memref<128x128xbf16, #tpu.memory_space<vmem>>, %arg5: memref<1x128xf32, #tpu.memory_space<vmem>>, %arg6: memref<128x128xbf16, #tpu.memory_space<vmem>>, %arg7: memref<1x128xf32, #tpu.memory_space<vmem>>, %arg8: memref<8x4xf32, #tpu.memory_space<vmem>>) attributes {dimension_semantics = [#tpu.dimension_semantics<parallel>], iteration_bounds = array<i64: 1>, scalar_prefetch = 0 : i64, scratch_operands = 0 : i64, tpu.core_type = #tpu.core_type<tc>, window_params = [{transform_indices = @transform_0, window_bounds = array<i64: 8, 8>}, {pipeline_mode = #tpu.pipeline_mode<synchronous>, transform_indices = @transform_1, window_bounds = array<i64: 8, 128>}, {pipeline_mode = #tpu.pipeline_mode<synchronous>, transform_indices = @transform_2, window_bounds = array<i64: 1, 128>}, {pipeline_mode = #tpu.pipeline_mode<synchronous>, transform_indices = @transform_3, window_bounds = array<i64: 128, 128>}, {pipeline_mode = #tpu.pipeline_mode<synchronous>, transform_indices = @transform_4, window_bounds = array<i64: 1, 128>}, {pipeline_mode = #tpu.pipeline_mode<synchronous>, transform_indices = @transform_5, window_bounds = array<i64: 128, 128>}, {pipeline_mode = #tpu.pipeline_mode<synchronous>, transform_indices = @transform_6, window_bounds = array<i64: 1, 128>}, {transform_indices = @transform_7, window_bounds = array<i64: 8, 4>}]} {
    %c0 = arith.constant 0 : index
    %c0_0 = arith.constant 0 : index
    %0 = vector.load %arg1[%c0, %c0_0] : memref<8x8xbf16, #tpu.memory_space<vmem>>, vector<8x8xbf16>
    %c0_1 = arith.constant 0 : index
    %c0_2 = arith.constant 0 : index
    %1 = vector.load %arg2[%c0_1, %c0_2] : memref<8x128xbf16, #tpu.memory_space<vmem>>, vector<8x128xbf16>
    %cst = arith.constant dense<0.000000e+00> : vector<8x128xf32>
    %2 = tpu.matmul %0, %1, %cst {dimension_numbers = #tpu.dot_dimension_numbers<[1], [0], [0], [1], [0, 0, 1, 1], [], []>} : vector<8x8xbf16>, vector<8x128xbf16>, vector<8x128xf32> -> vector<8x128xf32>
    %c0_3 = arith.constant 0 : index
    %c0_4 = arith.constant 0 : index
    %3 = vector.load %arg3[%c0_3, %c0_4] : memref<1x128xf32, #tpu.memory_space<vmem>>, vector<1x128xf32>
    %4 = vector.broadcast %3 : vector<1x128xf32> to vector<8x128xf32>
    %5 = arith.addf %2, %4 : vector<8x128xf32>
    %cst_5 = arith.constant 0.000000e+00 : f32
    %6 = vector.broadcast %cst_5 : f32 to vector<8x128xf32>
    %7 = arith.maximumf %5, %6 : vector<8x128xf32>
    %8 = arith.truncf %7 : vector<8x128xf32> to vector<8x128xbf16>
    %c0_6 = arith.constant 0 : index
    %c0_7 = arith.constant 0 : index
    %9 = vector.load %arg4[%c0_6, %c0_7] : memref<128x128xbf16, #tpu.memory_space<vmem>>, vector<128x128xbf16>
    %cst_8 = arith.constant dense<0.000000e+00> : vector<8x128xf32>
    %10 = tpu.matmul %8, %9, %cst_8 {dimension_numbers = #tpu.dot_dimension_numbers<[1], [0], [0], [1], [0, 0, 1, 1], [], []>} : vector<8x128xbf16>, vector<128x128xbf16>, vector<8x128xf32> -> vector<8x128xf32>
    %c0_9 = arith.constant 0 : index
    %c0_10 = arith.constant 0 : index
    %11 = vector.load %arg5[%c0_9, %c0_10] : memref<1x128xf32, #tpu.memory_space<vmem>>, vector<1x128xf32>
    %12 = vector.broadcast %11 : vector<1x128xf32> to vector<8x128xf32>
    %13 = arith.addf %10, %12 : vector<8x128xf32>
    %cst_11 = arith.constant 0.000000e+00 : f32
    %14 = vector.broadcast %cst_11 : f32 to vector<8x128xf32>
    %15 = arith.maximumf %13, %14 : vector<8x128xf32>
    %16 = arith.truncf %15 : vector<8x128xf32> to vector<8x128xbf16>
    %c0_12 = arith.constant 0 : index
    %c0_13 = arith.constant 0 : index
    %17 = vector.load %arg6[%c0_12, %c0_13] : memref<128x128xbf16, #tpu.memory_space<vmem>>, vector<128x128xbf16>
    %cst_14 = arith.constant dense<0.000000e+00> : vector<8x128xf32>
    %18 = tpu.matmul %16, %17, %cst_14 {dimension_numbers = #tpu.dot_dimension_numbers<[1], [0], [0], [1], [0, 0, 1, 1], [], []>} : vector<8x128xbf16>, vector<128x128xbf16>, vector<8x128xf32> -> vector<8x128xf32>
    %c0_15 = arith.constant 0 : index
    %c0_16 = arith.constant 0 : index
    %19 = vector.load %arg7[%c0_15, %c0_16] : memref<1x128xf32, #tpu.memory_space<vmem>>, vector<1x128xf32>
    %20 = vector.broadcast %19 : vector<1x128xf32> to vector<8x128xf32>
    %21 = arith.addf %18, %20 : vector<8x128xf32>
    %22 = vector.extract_strided_slice %21 {offsets = [0, 0], sizes = [8, 4], strides = [1, 1]} : vector<8x128xf32> to vector<8x4xf32>
    %c0_17 = arith.constant 0 : index
    %c0_18 = arith.constant 0 : index
    %23 = vector.load %arg8[%c0_17, %c0_18] : memref<8x4xf32, #tpu.memory_space<vmem>>, vector<8x4xf32>
    tpu.vector_store %arg8[%c0_17, %c0_18], %22 {strides = array<i32>} : memref<8x4xf32, #tpu.memory_space<vmem>>, vector<8x4xf32>,
    return
  }
  func.func @transform_0(%arg0: i32) -> (i32, i32) {
    %c0_i32 = arith.constant 0 : i32
    %c0_i32_0 = arith.constant 0 : i32
    return %arg0, %c0_i32 : i32, i32
  }
  func.func @transform_1(%arg0: i32) -> (i32, i32) {
    %c0_i32 = arith.constant 0 : i32
    %c0_i32_0 = arith.constant 0 : i32
    %c0_i32_1 = arith.constant 0 : i32
    return %c0_i32, %c0_i32_0 : i32, i32
  }
  func.func @transform_2(%arg0: i32) -> (i32, i32) {
    %c0_i32 = arith.constant 0 : i32
    %c0_i32_0 = arith.constant 0 : i32
    %c0_i32_1 = arith.constant 0 : i32
    return %c0_i32, %c0_i32_0 : i32, i32
  }
  func.func @transform_3(%arg0: i32) -> (i32, i32) {
    %c0_i32 = arith.constant 0 : i32
    %c0_i32_0 = arith.constant 0 : i32
    %c0_i32_1 = arith.constant 0 : i32
    return %c0_i32, %c0_i32_0 : i32, i32
  }
  func.func @transform_4(%arg0: i32) -> (i32, i32) {
    %c0_i32 = arith.constant 0 : i32
    %c0_i32_0 = arith.constant 0 : i32
    %c0_i32_1 = arith.constant 0 : i32
    return %c0_i32, %c0_i32_0 : i32, i32
  }
  func.func @transform_5(%arg0: i32) -> (i32, i32) {
    %c0_i32 = arith.constant 0 : i32
    %c0_i32_0 = arith.constant 0 : i32
    %c0_i32_1 = arith.constant 0 : i32
    return %c0_i32, %c0_i32_0 : i32, i32
  }
  func.func @transform_6(%arg0: i32) -> (i32, i32) {
    %c0_i32 = arith.constant 0 : i32
    %c0_i32_0 = arith.constant 0 : i32
    %c0_i32_1 = arith.constant 0 : i32
    return %c0_i32, %c0_i32_0 : i32, i32
  }
  func.func @transform_7(%arg0: i32) -> (i32, i32) {
    %c0_i32 = arith.constant 0 : i32
    %c0_i32_0 = arith.constant 0 : i32
    return %arg0, %c0_i32 : i32, i32
  }
}

</mosaic_0001>

<llo_original>
// kernel: tpu_custom_call.1
$region0: #{tpu_custom_call.1}
  #allocation0 [shape = 'u32[]', space=smem, size = 0x4, offset = 0x4, fixed_abs, tag = 'smem constant byte address 0x4 - core index']
  #allocation1 [shape = 'u32[144,128]{1,0:T(1,128)}', space=vmem, size = 0x12000, scoped, tag = 'internal scratch']
  %s0 = inlined_call_operand.hbm [shape: bf16[2,8], index: 0, kind: input, shape index: {}]
  %s1 = inlined_call_operand.hbm [shape: bf16[8,128], index: 1, kind: input, shape index: {}]
  %s2 = inlined_call_operand.vmem [shape: f32[1,128], index: 2, kind: input, shape index: {}]
  %s3 = inlined_call_operand.hbm [shape: bf16[128,128], index: 3, kind: input, shape index: {}]
  %s4 = inlined_call_operand.vmem [shape: f32[1,128], index: 4, kind: input, shape index: {}]
  %s5 = inlined_call_operand.hbm [shape: bf16[128,128], index: 5, kind: input, shape index: {}]
  %s6 = inlined_call_operand.vmem [shape: f32[1,128], index: 6, kind: input, shape index: {}]
  %s7 = inlined_call_operand.hbm [shape: f32[2,4], index: 7, kind: output, shape index: {}]
  %s8 = sld [smem:[#allocation0]]
  $region54: #{tpu_custom_call.1} parent=0
    _
  %s10 = ssub.s32 1, %s8
  %s11 = scalar_select 0, %s10, %s8
  $region1: #{tpu_custom_call.1} parent=0
    #allocation2 [shape = 'u8[2048]{0}', space=vmem, size = 0x800, scoped, tag = 'input window, operand 0, single buffered']
    #allocation3 [shape = 's32[1]{0}', space=sflag, size = 0x4, scoped, tag = 'scoped memory for tpu_custom_call.1']
    #allocation4 [shape = 's32[1]{0}', space=sflag, size = 0x4, scoped, tag = 'scoped memory for tpu_custom_call.1']
    #allocation5 [shape = 'u8[2048]{0}', space=vmem, size = 0x800, scoped, tag = 'input window, operand 1, single buffered']
    #allocation6 [shape = 's32[1]{0}', space=sflag, size = 0x4, scoped, tag = 'scoped memory for tpu_custom_call.1']
    #allocation7 [shape = 'u8[32768]{0}', space=vmem, size = 0x8000, scoped, tag = 'input window, operand 3, single buffered']
    #allocation8 [shape = 'u8[32768]{0}', space=vmem, size = 0x8000, scoped, tag = 'input window, operand 5, single buffered']
    #allocation9 [shape = 's32[1]{0}', space=sflag, size = 0x4, scoped, tag = 'scoped memory for tpu_custom_call.1']
    #allocation10 [shape = 'u8[4096]{0}', space=vmem, size = 0x1000, scoped, tag = 'output window, operand 0, single buffered']
    %12 = vsyncpa [#allocation3], 0
    %13 = vsyncpa [#allocation6], 0
    %14 = vsyncpa [#allocation9], 0
    %15 = vsyncpa [#allocation4], 0
    // Predicated region
    $region2: #{tpu_custom_call.1} parent=1 // pred_check
      _
    $region3: #{tpu_custom_call.1} parent=1 // pred_check_branch
      %17 = sbr.rel (0) target = $region5
    $region4: #{tpu_custom_call.1} parent=1 // pred_region
      %s19 = ssub.s32 64, 16
      %20 = vsyncadd [#allocation3], %s19
      %s21 = sshll.u32 [#allocation2], 4
      %s22 = int_to_ptr.vmem [resolvable:$true] %s21
      %27 = dma.hbm_to_vmem [thread:$0]  %s0, 16, %s22, [#allocation3], 16, 16, 1
    $region5: #{tpu_custom_call.1} parent=1 // pred_fallthru
      _
    // Predicated region
    $region6: #{tpu_custom_call.1} parent=1 // pred_check
      _
    $region7: #{tpu_custom_call.1} parent=1 // pred_check_branch
      %29 = sbr.rel (0) target = $region9
    $region8: #{tpu_custom_call.1} parent=1 // pred_region
      %s31 = ssub.s32 64, 64
      %32 = vsyncadd [#allocation6], %s31
      %s34 = sshll.u32 [#allocation5], 4
      %s35 = int_to_ptr.vmem [resolvable:$true] %s34
      %37 = dma.hbm_to_vmem [thread:$0]  %s1, 64, %s35, [#allocation6]
    $region9: #{tpu_custom_call.1} parent=1 // pred_fallthru
      _
    // Predicated region
    $region10: #{tpu_custom_call.1} parent=1 // pred_check
      _
    $region11: #{tpu_custom_call.1} parent=1 // pred_check_branch
      %39 = sbr.rel (0) target = $region13
    $region12: #{tpu_custom_call.1} parent=1 // pred_region
      _
    $region13: #{tpu_custom_call.1} parent=1 // pred_fallthru
      _
    // Predicated region
    $region14: #{tpu_custom_call.1} parent=1 // pred_check
      _
    $region15: #{tpu_custom_call.1} parent=1 // pred_check_branch
      %41 = sbr.rel (0) target = $region17
    $region16: #{tpu_custom_call.1} parent=1 // pred_region
      %s43 = ssub.s32 1024, 1024
      %44 = vsyncadd [#allocation6], %s43
      %s45 = sshll.u32 [#allocation7], 4
      %s46 = int_to_ptr.vmem [resolvable:$true] %s45
      %51 = dma.hbm_to_vmem [thread:$0]  %s3, 1024, %s46, [#allocation6], 64, 64, 4
    $region17: #{tpu_custom_call.1} parent=1 // pred_fallthru
      _
    // Predicated region
    $region18: #{tpu_custom_call.1} parent=1 // pred_check
      _
    $region19: #{tpu_custom_call.1} parent=1 // pred_check_branch
      %53 = sbr.rel (0) target = $region21
    $region20: #{tpu_custom_call.1} parent=1 // pred_region
      _
    $region21: #{tpu_custom_call.1} parent=1 // pred_fallthru
      _
    // Predicated region
    $region22: #{tpu_custom_call.1} parent=1 // pred_check
      _
    $region23: #{tpu_custom_call.1} parent=1 // pred_check_branch
      %55 = sbr.rel (0) target = $region25
    $region24: #{tpu_custom_call.1} parent=1 // pred_region
      %s57 = ssub.s32 1024, 1024
      %58 = vsyncadd [#allocation9], %s57
      %s59 = sshll.u32 [#allocation8], 4
      %s60 = int_to_ptr.vmem [resolvable:$true] %s59
      %65 = dma.hbm_to_vmem [thread:$0]  %s5, 1024, %s60, [#allocation9], 64, 64, 4
    $region25: #{tpu_custom_call.1} parent=1 // pred_fallthru
      _
    // Predicated region
    $region26: #{tpu_custom_call.1} parent=1 // pred_check
      _
    $region27: #{tpu_custom_call.1} parent=1 // pred_check_branch
      %67 = sbr.rel (0) target = $region29
    $region28: #{tpu_custom_call.1} parent=1 // pred_region
      _
    $region29: #{tpu_custom_call.1} parent=1 // pred_fallthru
      _
    // Predicated region
    $region30: #{tpu_custom_call.1} parent=1 // pred_check
      _
    $region31: #{tpu_custom_call.1} parent=1 // pred_check_branch
      %69 = sbr.rel (0) target = $region33
    $region32: #{tpu_custom_call.1} parent=1 // pred_region
      %70 = dma.done [#allocation3], 64
    $region33: #{tpu_custom_call.1} parent=1 // pred_fallthru
      _
    // Predicated region
    $region34: #{tpu_custom_call.1} parent=1 // pred_check
      _
    $region35: #{tpu_custom_call.1} parent=1 // pred_check_branch
      %72 = sbr.rel (0) target = $region37
    $region36: #{tpu_custom_call.1} parent=1 // pred_region
      %73 = dma.done [#allocation6], 64
    $region37: #{tpu_custom_call.1} parent=1 // pred_fallthru
      _
    // Predicated region
    $region38: #{tpu_custom_call.1} parent=1 // pred_check
      _
    $region39: #{tpu_custom_call.1} parent=1 // pred_check_branch
      %75 = sbr.rel (0) target = $region41
    $region40: #{tpu_custom_call.1} parent=1 // pred_region
      %76 = dma.done [#allocation6], 1024
    $region41: #{tpu_custom_call.1} parent=1 // pred_fallthru
      _
    // Predicated region
    $region42: #{tpu_custom_call.1} parent=1 // pred_check
      _
    $region43: #{tpu_custom_call.1} parent=1 // pred_check_branch
      %78 = sbr.rel (0) target = $region45
    $region44: #{tpu_custom_call.1} parent=1 // pred_region
      %79 = dma.done [#allocation9], 1024
    $region45: #{tpu_custom_call.1} parent=1 // pred_fallthru
      _
    %v81 = vld [vmem:[#allocation2] sm:$0x1]
    %v82 = vld [vmem:[#allocation2 + $0x1] sm:$0x1]
    %v83 = vld [vmem:[#allocation2 + $0x2] sm:$0x1]
    %v84 = vld [vmem:[#allocation2 + $0x3] sm:$0x1]
    %v85 = vld [vmem:[#allocation5] sm:$0xf]
    %v86 = vld [vmem:[%s2] sm:$0x1]
    %v88 = vlaneseq
    %v89 = vshrl.u32 %v88, 7
    %v90 = vsub.s32 0, %v89
    %v91 = vrot.slane %v86, %v90
    %v97 = vcombine.low %v81, %v82
    %v98 = vcombine.low %v83, %v84
    %v100 = vunpack.c.l.s4 1966171168
    %v101 = vunpack.c.0.s8 %v100
    %v102 = vlaneseq
    %v103 = vshrl.u32 %v102, 7
    %v104 = vsub.s32 %v101, %v103
    %v105 = vrot.slane %v97, %v104
    %v107 = vunpack.c.l.s4 1966171168
    %v108 = vunpack.c.0.s8 %v107
    %v109 = vlaneseq
    %v110 = vshrl.u32 %v109, 7
    %v111 = vsub.s32 %v108, %v110
    %v112 = vrot.slane %v98, %v111
    %v113 = vcombine.low %v105, %v112
    %v115 = vunpack.c.l.s4 1966171168
    %v116 = vunpack.c.0.s8 %v115
    %v117 = vlaneseq
    %v118 = vshrl.u32 %v117, 7
    %v119 = vsub.s32 %v116, %v118
    %v120 = vrot.slane %v113, %v119
    %vm121 = vcmask 64512
    %v123 = vsel %vm121, %v120, 0
    %vm125 = vcmask 1043456
    %v127 = vsel %vm125, %v85, 0
    %129 = vmatprep.subr.bf16.mxu0 0
    %130 = vmatpush1.bf16.msra.mxu0 %v127
    %131 = vmatprep.subr.bf16.mxu0 0
    %132 = vmatpush1.bf16.msra.mxu0 0
    %133 = vmatprep.subr.bf16.mxu0 0
    %134 = vmatpush1.bf16.msra.mxu0 0
    %135 = vmatprep.subr.bf16.mxu0 0
    %136 = vmatpush1.bf16.msra.mxu0 0
    %137 = vmatprep.subr.bf16.mxu0 0
    %138 = vmatpush1.bf16.msra.mxu0 0
    %139 = vmatprep.subr.bf16.mxu0 0
    %140 = vmatpush1.bf16.msra.mxu0 0
    %141 = vmatprep.subr.bf16.mxu0 0
    %142 = vmatpush1.bf16.msra.mxu0 0
    %143 = vmatprep.subr.bf16.mxu0 0
    %144 = vmatpush1.bf16.msra.mxu0 0
    %145 = vmatprep.subr.bf16.mxu0 0
    %146 = vmatpush1.bf16.msra.mxu0 0
    %147 = vmatprep.subr.bf16.mxu0 0
    %148 = vmatpush1.bf16.msra.mxu0 0
    %149 = vmatprep.subr.bf16.mxu0 0
    %150 = vmatpush1.bf16.msra.mxu0 0
    %151 = vmatprep.subr.bf16.mxu0 0
    %152 = vmatpush1.bf16.msra.mxu0 0
    %153 = vmatprep.subr.bf16.mxu0 0
    %154 = vmatpush1.bf16.msra.mxu0 0
    %155 = vmatprep.subr.bf16.mxu0 0
    %156 = vmatpush1.bf16.msra.mxu0 0
    %157 = vmatprep.subr.bf16.mxu0 0
    %158 = vmatpush1.bf16.msra.mxu0 0
    %159 = vmatprep.subr.bf16.mxu0 0
    %160 = vmatpush1.bf16.msra.mxu0 0
    %161 = vmatprep.mubr.bf16.mxu0 0
    %162 = vmatmul.mubr.bf16.gmra.mrb[0].mxu0 %v123
    %v163 = vpop.f32.mrb[0].mxu0
    %v164 = vadd.f32 %v91, %v163
    %v165 = vpop.f32.mrb[0].mxu0
    %v166 = vpop.f32.mrb[0].mxu0
    %v167 = vpop.f32.mrb[0].mxu0
    %168 = vdwg.mxu0
    %v169 = vmax.f32 %v164, 0.0
    %v170 = vpack.c.bf16 %v169, %v169
    %v171 = vld [vmem:[#allocation7] sm:$0xf]
    %v172 = vld [vmem:[#allocation7 + $0x4] sm:$0xf]
    %v173 = vld [vmem:[#allocation7 + $0x8] sm:$0xf]
    %v174 = vld [vmem:[#allocation7 + $0xc] sm:$0xf]
    %v175 = vld [vmem:[#allocation7 + $0x10] sm:$0xf]
    %v176 = vld [vmem:[#allocation7 + $0x14] sm:$0xf]
    %v177 = vld [vmem:[#allocation7 + $0x18] sm:$0xf]
    %v178 = vld [vmem:[#allocation7 + $0x1c] sm:$0xf]
    %v179 = vld [vmem:[#allocation7 + $0x20] sm:$0xf]
    %v180 = vld [vmem:[#allocation7 + $0x24] sm:$0xf]
    %v181 = vld [vmem:[#allocation7 + $0x28] sm:$0xf]
    %v182 = vld [vmem:[#allocation7 + $0x2c] sm:$0xf]
    %v183 = vld [vmem:[#allocation7 + $0x30] sm:$0xf]
    %v184 = vld [vmem:[#allocation7 + $0x34] sm:$0xf]
    %v185 = vld [vmem:[#allocation7 + $0x38] sm:$0xf]
    %v186 = vld [vmem:[#allocation7 + $0x3c] sm:$0xf]
    %v187 = vld [vmem:[%s4] sm:$0x1]
    %v189 = vlaneseq
    %v190 = vshrl.u32 %v189, 7
    %v191 = vsub.s32 0, %v190
    %v192 = vrot.slane %v187, %v191
    %v210 = vunpack.c.l.b16 %v171
    %v211 = vunpack.c.l.b16 %v172
    %v212 = vunpack.c.l.b16 %v173
    %v213 = vunpack.c.l.b16 %v174
    %v214 = vunpack.c.l.b16 %v175
    %v215 = vunpack.c.l.b16 %v176
    %v216 = vunpack.c.l.b16 %v177
    %v217 = vunpack.c.l.b16 %v178
    %v218 = vunpack.c.l.b16 %v179
    %v219 = vunpack.c.l.b16 %v180
    %v220 = vunpack.c.l.b16 %v181
    %v221 = vunpack.c.l.b16 %v182
    %v222 = vunpack.c.l.b16 %v183
    %v223 = vunpack.c.l.b16 %v184
    %v224 = vunpack.c.l.b16 %v185
    %v225 = vunpack.c.l.b16 %v186
    %v226 = vpack.c.b16 %v211, %v210
    %v227 = vpack.c.b16 %v213, %v212
    %v228 = vpack.c.b16 %v215, %v214
    %v229 = vpack.c.b16 %v217, %v216
    %v230 = vpack.c.b16 %v219, %v218
    %v231 = vpack.c.b16 %v221, %v220
    %v232 = vpack.c.b16 %v223, %v222
    %v233 = vpack.c.b16 %v225, %v224
    %242 = vmatprep.subr.bf16.mxu0 0
    %243 = vmatpush1.bf16.msra.mxu0 %v226
    %244 = vmatprep.subr.bf16.mxu0 0
    %245 = vmatpush1.bf16.msra.mxu0 %v227
    %246 = vmatprep.subr.bf16.mxu0 0
    %247 = vmatpush1.bf16.msra.mxu0 %v228
    %248 = vmatprep.subr.bf16.mxu0 0
    %249 = vmatpush1.bf16.msra.mxu0 %v229
    %250 = vmatprep.subr.bf16.mxu0 0
    %251 = vmatpush1.bf16.msra.mxu0 %v230
    %252 = vmatprep.subr.bf16.mxu0 0
    %253 = vmatpush1.bf16.msra.mxu0 %v231
    %254 = vmatprep.subr.bf16.mxu0 0
    %255 = vmatpush1.bf16.msra.mxu0 %v232
    %256 = vmatprep.subr.bf16.mxu0 0
    %257 = vmatpush1.bf16.msra.mxu0 %v233
    %258 = vmatprep.subr.bf16.mxu0 0
    %259 = vmatpush1.bf16.msra.mxu0 0
    %260 = vmatprep.subr.bf16.mxu0 0
    %261 = vmatpush1.bf16.msra.mxu0 0
    %262 = vmatprep.subr.bf16.mxu0 0
    %263 = vmatpush1.bf16.msra.mxu0 0
    %264 = vmatprep.subr.bf16.mxu0 0
    %265 = vmatpush1.bf16.msra.mxu0 0
    %266 = vmatprep.subr.bf16.mxu0 0
    %267 = vmatpush1.bf16.msra.mxu0 0
    %268 = vmatprep.subr.bf16.mxu0 0
    %269 = vmatpush1.bf16.msra.mxu0 0
    %270 = vmatprep.subr.bf16.mxu0 0
    %271 = vmatpush1.bf16.msra.mxu0 0
    %272 = vmatprep.subr.bf16.mxu0 0
    %273 = vmatpush1.bf16.msra.mxu0 0
    %274 = vmatprep.mubr.bf16.mxu0 0
    %275 = vmatmul.mubr.bf16.gmra.mrb[0].mxu0 %v170
    %v276 = vpop.f32.mrb[0].mxu0
    %v277 = vadd.f32 %v192, %v276
    %v278 = vpop.f32.mrb[0].mxu0
    %v279 = vpop.f32.mrb[0].mxu0
    %v280 = vpop.f32.mrb[0].mxu0
    %281 = vdwg.mxu0
    %v282 = vmax.f32 %v277, 0.0
    %v283 = vpack.c.bf16 %v282, %v282
    %v284 = vld [vmem:[#allocation8] sm:$0xf]
    %v285 = vld [vmem:[#allocation8 + $0x4] sm:$0xf]
    %v286 = vld [vmem:[#allocation8 + $0x8] sm:$0xf]
    %v287 = vld [vmem:[#allocation8 + $0xc] sm:$0xf]
    %v288 = vld [vmem:[#allocation8 + $0x10] sm:$0xf]
    %v289 = vld [vmem:[#allocation8 + $0x14] sm:$0xf]
    %v290 = vld [vmem:[#allocation8 + $0x18] sm:$0xf]
    %v291 = vld [vmem:[#allocation8 + $0x1c] sm:$0xf]
    %v292 = vld [vmem:[#allocation8 + $0x20] sm:$0xf]
    %v293 = vld [vmem:[#allocation8 + $0x24] sm:$0xf]
    %v294 = vld [vmem:[#allocation8 + $0x28] sm:$0xf]
    %v295 = vld [vmem:[#allocation8 + $0x2c] sm:$0xf]
    %v296 = vld [vmem:[#allocation8 + $0x30] sm:$0xf]
    %v297 = vld [vmem:[#allocation8 + $0x34] sm:$0xf]
    %v298 = vld [vmem:[#allocation8 + $0x38] sm:$0xf]
    %v299 = vld [vmem:[#allocation8 + $0x3c] sm:$0xf]
    %v300 = vld [vmem:[%s6] sm:$0x1]
    %v302 = vlaneseq
    %v303 = vshrl.u32 %v302, 7
    %v304 = vsub.s32 0, %v303
    %v305 = vrot.slane %v300, %v304
    %v323 = vunpack.c.l.b16 %v284
    %v324 = vunpack.c.l.b16 %v285
    %v325 = vunpack.c.l.b16 %v286
    %v326 = vunpack.c.l.b16 %v287
    %v327 = vunpack.c.l.b16 %v288
    %v328 = vunpack.c.l.b16 %v289
    %v329 = vunpack.c.l.b16 %v290
    %v330 = vunpack.c.l.b16 %v291
    %v331 = vunpack.c.l.b16 %v292
    %v332 = vunpack.c.l.b16 %v293
    %v333 = vunpack.c.l.b16 %v294
    %v334 = vunpack.c.l.b16 %v295
    %v335 = vunpack.c.l.b16 %v296
    %v336 = vunpack.c.l.b16 %v297
    %v337 = vunpack.c.l.b16 %v298
    %v338 = vunpack.c.l.b16 %v299
    %v339 = vpack.c.b16 %v324, %v323
    %v340 = vpack.c.b16 %v326, %v325
    %v341 = vpack.c.b16 %v328, %v327
    %v342 = vpack.c.b16 %v330, %v329
    %v343 = vpack.c.b16 %v332, %v331
    %v344 = vpack.c.b16 %v334, %v333
    %v345 = vpack.c.b16 %v336, %v335
    %v346 = vpack.c.b16 %v338, %v337
    %355 = vmatprep.subr.bf16.mxu0 0
    %356 = vmatpush1.bf16.msra.mxu0 %v339
    %357 = vmatprep.subr.bf16.mxu0 0
    %358 = vmatpush1.bf16.msra.mxu0 %v340
    %359 = vmatprep.subr.bf16.mxu0 0
    %360 = vmatpush1.bf16.msra.mxu0 %v341
    %361 = vmatprep.subr.bf16.mxu0 0
    %362 = vmatpush1.bf16.msra.mxu0 %v342
    %363 = vmatprep.subr.bf16.mxu0 0
    %364 = vmatpush1.bf16.msra.mxu0 %v343
    %365 = vmatprep.subr.bf16.mxu0 0
    %366 = vmatpush1.bf16.msra.mxu0 %v344
    %367 = vmatprep.subr.bf16.mxu0 0
    %368 = vmatpush1.bf16.msra.mxu0 %v345
    %369 = vmatprep.subr.bf16.mxu0 0
    %370 = vmatpush1.bf16.msra.mxu0 %v346
    %371 = vmatprep.subr.bf16.mxu0 0
    %372 = vmatpush1.bf16.msra.mxu0 0
    %373 = vmatprep.subr.bf16.mxu0 0
    %374 = vmatpush1.bf16.msra.mxu0 0
    %375 = vmatprep.subr.bf16.mxu0 0
    %376 = vmatpush1.bf16.msra.mxu0 0
    %377 = vmatprep.subr.bf16.mxu0 0
    %378 = vmatpush1.bf16.msra.mxu0 0
    %379 = vmatprep.subr.bf16.mxu0 0
    %380 = vmatpush1.bf16.msra.mxu0 0
    %381 = vmatprep.subr.bf16.mxu0 0
    %382 = vmatpush1.bf16.msra.mxu0 0
    %383 = vmatprep.subr.bf16.mxu0 0
    %384 = vmatpush1.bf16.msra.mxu0 0
    %385 = vmatprep.subr.bf16.mxu0 0
    %386 = vmatpush1.bf16.msra.mxu0 0
    %387 = vmatprep.mubr.bf16.mxu0 0
    %388 = vmatmul.mubr.bf16.gmra.mrb[0].mxu0 %v283
    %v389 = vpop.f32.mrb[0].mxu0
    %v390 = vadd.f32 %v305, %v389
    %v391 = vpop.f32.mrb[0].mxu0
    %v392 = vpop.f32.mrb[0].mxu0
    %v393 = vpop.f32.mrb[0].mxu0
    %394 = vdwg.mxu0
    %vm395 = vcmask 31744
    %396 = vst.msk [vmem:[#allocation10] sm:$0xff] %vm395, %v390
    // Predicated region
    $region46: #{tpu_custom_call.1} parent=1 // pred_check
      _
    $region47: #{tpu_custom_call.1} parent=1 // pred_check_branch
      %398 = sbr.rel (0) target = $region49
    $region48: #{tpu_custom_call.1} parent=1 // pred_region
      %s400 = ssub.s32 128, 32
      %401 = vsyncadd [#allocation4], %s400
      %s402 = sshll.u32 [#allocation10], 4
      %s403 = int_to_ptr.vmem [resolvable:$true] %s402
      %408 = dma.vmem_to_hbm [thread:$0]  %s403, 32, %s7, [#allocation4], 32, 32, 2
    $region49: #{tpu_custom_call.1} parent=1 // pred_fallthru
      _
    // Predicated region
    $region50: #{tpu_custom_call.1} parent=1 // pred_check
      _
    $region51: #{tpu_custom_call.1} parent=1 // pred_check_branch
      %410 = sbr.rel (0) target = $region53
    $region52: #{tpu_custom_call.1} parent=1 // pred_region
      %411 = dma.done [#allocation4], 128
    $region53: #{tpu_custom_call.1} parent=1 // pred_fallthru
      _
    %412 = vsyncpa [#allocation3], 1
    %413 = vsyncpa [#allocation6], 1
    %414 = vsyncpa [#allocation9], 1
    %415 = vsyncpa [#allocation4], 1

</llo_original>
